<compile_context>
chip_gen: v5e
topology: v5e:2x2
jax: 0.10.0
libtpu: 0.0.40
codegen_flags: <defaults>
</compile_context>

<pallas_src>
import functools

import jax
import jax.numpy as jnp
from jax.experimental import pallas as pl
from jax.experimental.pallas import tpu as pltpu


def _round_up(x, m):
    return ((x + m - 1) // m) * m


def _vmem_limit_bytes():
    # Review: don't leave half of v5e/v6e's 128 MiB idle; stay <= ~56 MiB on
    # v7x's 64 MiB physical VMEM.
    try:
        cap = int(pltpu.get_tpu_info().vmem_capacity_bytes)
    except Exception:
        cap = 64 * 1024 * 1024
    return int(min(cap * 7 // 8, 100 * 1024 * 1024))


# ---------------------------------------------------------------------------
# Kernel 1: packed conv (single lane-dense bf16 MXU matmul, f32 accum) plus
# per-row-tile BatchNorm partial sums (bias-free "shifted" sums).
#   grid = (num row tiles,), all "parallel".
# ---------------------------------------------------------------------------
def _conv_stats_kernel(x_ref, w_ref, y_ref, st_ref):
    y = jnp.dot(x_ref[...], w_ref[...], preferred_element_type=jnp.float32)
    y_ref[...] = y.astype(y_ref.dtype)            # bf16 intermediate store
    # Partial BN statistics on the bias-free conv output.  Zero-padded rows
    # produce exactly zero, so no mask is required.
    st_ref[...] = jnp.concatenate(
        [jnp.sum(y, axis=0, keepdims=True),
         jnp.sum(y * y, axis=0, keepdims=True)], axis=0)


# ---------------------------------------------------------------------------
# Kernel 2: folded (bias + BatchNorm) scale/shift + LeakyReLU, tiled over M.
# ---------------------------------------------------------------------------
def _norm_lrelu_kernel(y_ref, scale_ref, shift_ref, o_ref, *, slope):
    z = y_ref[...].astype(jnp.float32) * scale_ref[...] + shift_ref[...]
    o_ref[...] = jnp.where(z > 0, z, slope * z).astype(o_ref.dtype)


# ---------------------------------------------------------------------------
# Wrapper: ConvBlock forward (PyTorch NCHW in / NCHW out).
# ---------------------------------------------------------------------------
def conv_block_forward(x_nchw, params, *, kernel_size=4, stride=2, padding=1,
                       use_bn=True, eps=1e-5, negative_slope=0.2,
                       tile_rows=2048, out_dtype=None):
    N, C_in, H, W = x_nchw.shape
    w = params["conv_w"]                           # (C_out, C_in, kH, kW)
    b = params["conv_b"].astype(jnp.float32)       # (C_out,)
    C_out = w.shape[0]
    kH = kW = kernel_size
    Ho = (H + 2 * padding - kH) // stride + 1
    Wo = (W + 2 * padding - kW) // stride + 1
    K = kH * kW * C_in                             # packed contraction dim
    C_pad = _round_up(max(C_out, 128), 128)        # lane-dense output channels
    out_dtype = x_nchw.dtype if out_dtype is None else out_dtype

    # ---- layout prep (plain JAX, done in bf16) ------------------------------
    x_nhwc = jnp.transpose(x_nchw, (0, 2, 3, 1)).astype(jnp.bfloat16)
    xp = jnp.pad(x_nhwc, ((0, 0), (padding, padding), (padding, padding), (0, 0)))
    taps = []
    for dh in range(kH):
        for dw in range(kW):
            taps.append(jax.lax.slice(
                xp, (0, dh, dw, 0),
                (N, dh + (Ho - 1) * stride + 1, dw + (Wo - 1) * stride + 1, C_in),
                (1, stride, stride, 1)))           # (N, Ho, Wo, C_in)
    lhs = jnp.concatenate(taps, axis=-1).reshape(N * Ho * Wo, K)   # bf16

    # packed weights (K, C_pad); K row order = (dh, dw, c) matching the lhs.
    wt = jnp.transpose(w.astype(jnp.float32), (2, 3, 1, 0)).reshape(K, C_out)
    wt = jnp.pad(wt, ((0, 0), (0, C_pad - C_out))).astype(jnp.bfloat16)

    # ---- row tiling ----------------------------------------------------------
    M = N * Ho * Wo
    tr = min(tile_rows, _round_up(M, 8))
    row_bytes = 2 * K + 2 * C_pad + 4 * C_pad      # lhs + y (bf16) + out (f32) per row
    max_tr = max(256, (8 * 1024 * 1024 // row_bytes) // 8 * 8)
    tr = max(8, min(tr, max_tr))
    Mp = pl.cdiv(M, tr) * tr
    n_tiles = Mp // tr
    if Mp != M:
        lhs = jnp.pad(lhs, ((0, Mp - M), (0, 0)))

    vmem_limit = _vmem_limit_bytes()

    # ---- Pallas kernel 1: packed conv + fused BN partial statistics ---------
    y_conv, stats = pl.pallas_call(
        _conv_stats_kernel,
        grid=(n_tiles,),
        in_specs=[
            pl.BlockSpec((tr, K), lambda i: (i, 0)),
            pl.BlockSpec((K, C_pad), lambda i: (0, 0)),   # constant -> weights stay resident
        ],
        out_specs=(
            pl.BlockSpec((tr, C_pad), lambda i: (i, 0)),
            pl.BlockSpec((None, 2, C_pad), lambda i: (i, 0, 0)),
        ),
        out_shape=(
            jax.ShapeDtypeStruct((Mp, C_pad), jnp.bfloat16),
            jax.ShapeDtypeStruct((n_tiles, 2, C_pad), jnp.float32),
        ),
        compiler_params=pltpu.CompilerParams(
            dimension_semantics=("parallel",),
            vmem_limit_bytes=vmem_limit),
    )(lhs, wt)

    # ---- fold conv bias + batch statistics into per-channel scale/shift -----
    b_pad = jnp.pad(b, (0, C_pad - C_out))
    if use_bn:
        count = jnp.float32(M)
        tot = jnp.sum(stats, axis=0)                            # (2, C_pad)
        mean_c = tot[0] / count                                 # bias-free conv mean
        var = jnp.maximum(tot[1] / count - mean_c * mean_c, 0.0)  # biased var (training)
        gamma = jnp.pad(params["bn_gamma"].astype(jnp.float32), (0, C_pad - C_out))
        beta = jnp.pad(params["bn_beta"].astype(jnp.float32), (0, C_pad - C_out))
        g_inv = gamma * jax.lax.rsqrt(var + eps)
        scale = g_inv.reshape(1, C_pad)
        shift = (beta - mean_c * g_inv).reshape(1, C_pad)       # conv bias cancels under BN
    else:
        scale = jnp.ones((1, C_pad), jnp.float32)
        shift = b_pad.reshape(1, C_pad)

    # ---- Pallas kernel 2: scale/shift + LeakyReLU, tiled over M -------------
    out_full = pl.pallas_call(
        functools.partial(_norm_lrelu_kernel, slope=negative_slope),
        grid=(n_tiles,),
        in_specs=[
            pl.BlockSpec((tr, C_pad), lambda i: (i, 0)),
            pl.BlockSpec((1, C_pad), lambda i: (0, 0)),
            pl.BlockSpec((1, C_pad), lambda i: (0, 0)),
        ],
        out_specs=pl.BlockSpec((tr, C_pad), lambda i: (i, 0)),
        out_shape=jax.ShapeDtypeStruct((Mp, C_pad), out_dtype),
        compiler_params=pltpu.CompilerParams(
            dimension_semantics=("parallel",),
            vmem_limit_bytes=vmem_limit),
    )(y_conv, scale, shift)

    # ---- drop padding, back to NCHW (module contract) ------------------------
    out = out_full[:M, :C_out].reshape(N, Ho, Wo, C_out)
    return jnp.transpose(out, (0, 3, 1, 2))


# ---------------------------------------------------------------------------
# Deterministic parameter construction (mirrors nn.Conv2d / nn.BatchNorm2d)
# ---------------------------------------------------------------------------
def init_params(key, in_channels, out_channels, kernel_size=4):
    kw, kb = jax.random.split(key)
    fan_in = in_channels * kernel_size * kernel_size
    bound = 1.0 / (fan_in ** 0.5)
    conv_w = jax.random.uniform(kw, (out_channels, in_channels, kernel_size, kernel_size),
                                minval=-bound, maxval=bound, dtype=jnp.float32)
    conv_b = jax.random.uniform(kb, (out_channels,), minval=-bound, maxval=bound,
                                dtype=jnp.float32)
    bn_gamma = jnp.ones((out_channels,), jnp.float32)
    bn_beta = jnp.zeros((out_channels,), jnp.float32)
    return {"conv_w": conv_w, "conv_b": conv_b,
            "bn_gamma": bn_gamma, "bn_beta": bn_beta}


# ---------------------------------------------------------------------------
# Pure-JAX reference for validation
# ---------------------------------------------------------------------------
def _reference_forward(x_nchw, params, *, use_bn=True, eps=1e-5, slope=0.2):
    y = jax.lax.conv_general_dilated(
        x_nchw.astype(jnp.float32), params["conv_w"].astype(jnp.float32),
        window_strides=(2, 2), padding=((1, 1), (1, 1)),
        dimension_numbers=("NCHW", "OIHW", "NCHW"),
        precision=jax.lax.Precision.HIGHEST)
    y = y + params["conv_b"].reshape(1, -1, 1, 1)
    if use_bn:
        mean = jnp.mean(y, axis=(0, 2, 3), keepdims=True)
        var = jnp.mean((y - mean) ** 2, axis=(0, 2, 3), keepdims=True)
        y = (y - mean) * jax.lax.rsqrt(var + eps)
        y = y * params["bn_gamma"].reshape(1, -1, 1, 1) \
            + params["bn_beta"].reshape(1, -1, 1, 1)
    return jnp.where(y > 0, y, slope * y)


if __name__ == "__main__":
    key = jax.random.PRNGKey(0)
    k_x, k_p = jax.random.split(key)

    N, C_in, H, W = 2, 4, 16, 16
    C_out = 8

    x = jax.random.normal(k_x, (N, C_in, H, W), dtype=jnp.float32)
    params = init_params(k_p, C_in, C_out, kernel_size=4)

    # --- with BatchNorm (training-mode batch statistics) ---------------------
    fwd_bn = jax.jit(functools.partial(conv_block_forward, use_bn=True))
    out = jax.block_until_ready(fwd_bn(x, params))
    assert out.shape == (N, C_out, H // 2, W // 2), out.shape
    assert out.dtype == jnp.float32
    assert bool(jnp.all(jnp.isfinite(out)))
    ref = _reference_forward(x, params, use_bn=True)
    assert bool(jnp.allclose(out, ref, atol=0.15, rtol=0.1)), (
        "BN path: max abs err vs reference: %f" % float(jnp.max(jnp.abs(out - ref))))

    # --- without BatchNorm ----------------------------------------------------
    fwd_nobn = jax.jit(functools.partial(conv_block_forward, use_bn=False))
    out2 = jax.block_until_ready(fwd_nobn(x, params))
    ref2 = _reference_forward(x, params, use_bn=False)
    assert bool(jnp.allclose(out2, ref2, atol=0.15, rtol=0.1)), (
        "no-BN path: max abs err vs reference: %f" % float(jnp.max(jnp.abs(out2 - ref2))))

    print("KERNEL_OK")
</pallas_src>

<mosaic_0001>
module attributes {stable_mosaic.version = 11 : i64} {
  func.func @_conv_stats_kernel(%arg0: i32, %arg1: memref<128x64xbf16, #tpu.memory_space<vmem>>, %arg2: memref<64x128xbf16, #tpu.memory_space<vmem>>, %arg3: memref<128x128xbf16, #tpu.memory_space<vmem>>, %arg4: memref<1x2x128xf32, #tpu.memory_space<vmem>>) attributes {dimension_semantics = [#tpu.dimension_semantics<parallel>], iteration_bounds = array<i64: 1>, scalar_prefetch = 0 : i64, scratch_operands = 0 : i64, tpu.core_type = #tpu.core_type<tc>, window_params = [{transform_indices = @transform_0, window_bounds = array<i64: 128, 64>}, {pipeline_mode = #tpu.pipeline_mode<synchronous>, transform_indices = @transform_1, window_bounds = array<i64: 64, 128>}, {transform_indices = @transform_2, window_bounds = array<i64: 128, 128>}, {transform_indices = @transform_3, window_bounds = array<i64: 1, 2, 128>}]} {
    %c0 = arith.constant 0 : index
    %c0_0 = arith.constant 0 : index
    %0 = vector.load %arg1[%c0, %c0_0] : memref<128x64xbf16, #tpu.memory_space<vmem>>, vector<128x64xbf16>
    %c0_1 = arith.constant 0 : index
    %c0_2 = arith.constant 0 : index
    %1 = vector.load %arg2[%c0_1, %c0_2] : memref<64x128xbf16, #tpu.memory_space<vmem>>, vector<64x128xbf16>
    %cst = arith.constant dense<0.000000e+00> : vector<128x128xf32>
    %2 = tpu.matmul %0, %1, %cst {dimension_numbers = #tpu.dot_dimension_numbers<[1], [0], [0], [1], [0, 0, 1, 1], [], []>} : vector<128x64xbf16>, vector<64x128xbf16>, vector<128x128xf32> -> vector<128x128xf32>
    %3 = arith.truncf %2 : vector<128x128xf32> to vector<128x128xbf16>
    %c0_3 = arith.constant 0 : index
    %c0_4 = arith.constant 0 : index
    %4 = vector.load %arg3[%c0_3, %c0_4] : memref<128x128xbf16, #tpu.memory_space<vmem>>, vector<128x128xbf16>
    tpu.vector_store %arg3[%c0_3, %c0_4], %3 {strides = array<i32>} : memref<128x128xbf16, #tpu.memory_space<vmem>>, vector<128x128xbf16>,
    %cst_5 = arith.constant dense<0.000000e+00> : vector<128xf32>
    %5 = vector.multi_reduction <add>, %2, %cst_5 [0] : vector<128x128xf32> to vector<128xf32>
    %6 = vector.shape_cast %5 : vector<128xf32> to vector<1x128xf32>
    %7 = arith.mulf %2, %2 : vector<128x128xf32>
    %cst_6 = arith.constant dense<0.000000e+00> : vector<128xf32>
    %8 = vector.multi_reduction <add>, %7, %cst_6 [0] : vector<128x128xf32> to vector<128xf32>
    %9 = vector.shape_cast %8 : vector<128xf32> to vector<1x128xf32>
    %10 = tpu.concatenate %6, %9 in 0 : vector<1x128xf32>, vector<1x128xf32> -> vector<2x128xf32>
    %c0_7 = arith.constant 0 : index
    %c0_8 = arith.constant 0 : index
    %c0_9 = arith.constant 0 : index
    %11 = vector.load %arg4[%c0_7, %c0_8, %c0_9] : memref<1x2x128xf32, #tpu.memory_space<vmem>>, vector<1x2x128xf32>
    %12 = vector.shape_cast %11 : vector<1x2x128xf32> to vector<2x128xf32>
    %13 = vector.shape_cast %10 : vector<2x128xf32> to vector<1x2x128xf32>
    tpu.vector_store %arg4[%c0_7, %c0_8, %c0_9], %13 {strides = array<i32>} : memref<1x2x128xf32, #tpu.memory_space<vmem>>, vector<1x2x128xf32>,
    return
  }
  func.func @transform_0(%arg0: i32) -> (i32, i32) {
    %c0_i32 = arith.constant 0 : i32
    %c0_i32_0 = arith.constant 0 : i32
    return %arg0, %c0_i32 : i32, i32
  }
  func.func @transform_1(%arg0: i32) -> (i32, i32) {
    %c0_i32 = arith.constant 0 : i32
    %c0_i32_0 = arith.constant 0 : i32
    %c0_i32_1 = arith.constant 0 : i32
    return %c0_i32, %c0_i32_0 : i32, i32
  }
  func.func @transform_2(%arg0: i32) -> (i32, i32) {
    %c0_i32 = arith.constant 0 : i32
    %c0_i32_0 = arith.constant 0 : i32
    return %arg0, %c0_i32 : i32, i32
  }
  func.func @transform_3(%arg0: i32) -> (i32, i32, i32) {
    %c0_i32 = arith.constant 0 : i32
    %c0_i32_0 = arith.constant 0 : i32
    %c0_i32_1 = arith.constant 0 : i32
    return %arg0, %c0_i32, %c0_i32_0 : i32, i32, i32
  }
}

module attributes {stable_mosaic.version = 11 : i64} {
  func.func @_norm_lrelu_kernel(%arg0: i32, %arg1: memref<128x128xbf16, #tpu.memory_space<vmem>>, %arg2: memref<1x128xf32, #tpu.memory_space<vmem>>, %arg3: memref<1x128xf32, #tpu.memory_space<vmem>>, %arg4: memref<128x128xf32, #tpu.memory_space<vmem>>) attributes {dimension_semantics = [#tpu.dimension_semantics<parallel>], iteration_bounds = array<i64: 1>, scalar_prefetch = 0 : i64, scratch_operands = 0 : i64, tpu.core_type = #tpu.core_type<tc>, window_params = [{transform_indices = @transform_0, window_bounds = array<i64: 128, 128>}, {pipeline_mode = #tpu.pipeline_mode<synchronous>, transform_indices = @transform_1, window_bounds = array<i64: 1, 128>}, {pipeline_mode = #tpu.pipeline_mode<synchronous>, transform_indices = @transform_2, window_bounds = array<i64: 1, 128>}, {transform_indices = @transform_3, window_bounds = array<i64: 128, 128>}]} {
    %c0 = arith.constant 0 : index
    %c0_0 = arith.constant 0 : index
    %0 = vector.load %arg1[%c0, %c0_0] : memref<128x128xbf16, #tpu.memory_space<vmem>>, vector<128x128xbf16>
    %1 = arith.extf %0 : vector<128x128xbf16> to vector<128x128xf32>
    %c0_1 = arith.constant 0 : index
    %c0_2 = arith.constant 0 : index
    %2 = vector.load %arg2[%c0_1, %c0_2] : memref<1x128xf32, #tpu.memory_space<vmem>>, vector<1x128xf32>
    %3 = vector.broadcast %2 : vector<1x128xf32> to vector<128x128xf32>
    %4 = arith.mulf %1, %3 : vector<128x128xf32>
    %c0_3 = arith.constant 0 : index
    %c0_4 = arith.constant 0 : index
    %5 = vector.load %arg3[%c0_3, %c0_4] : memref<1x128xf32, #tpu.memory_space<vmem>>, vector<1x128xf32>
    %6 = vector.broadcast %5 : vector<1x128xf32> to vector<128x128xf32>
    %7 = arith.addf %4, %6 : vector<128x128xf32>
    %cst = arith.constant 0.000000e+00 : f32
    %8 = vector.broadcast %cst : f32 to vector<128x128xf32>
    %9 = arith.cmpf ogt, %7, %8 : vector<128x128xf32>
    %cst_5 = arith.constant 2.000000e-01 : f32
    %10 = vector.broadcast %cst_5 : f32 to vector<128x128xf32>
    %11 = arith.mulf %10, %7 : vector<128x128xf32>
    %12 = arith.select %9, %7, %11 : vector<128x128xi1>, vector<128x128xf32>
    %c0_6 = arith.constant 0 : index
    %c0_7 = arith.constant 0 : index
    %13 = vector.load %arg4[%c0_6, %c0_7] : memref<128x128xf32, #tpu.memory_space<vmem>>, vector<128x128xf32>
    tpu.vector_store %arg4[%c0_6, %c0_7], %12 {strides = array<i32>} : memref<128x128xf32, #tpu.memory_space<vmem>>, vector<128x128xf32>,
    return
  }
  func.func @transform_0(%arg0: i32) -> (i32, i32) {
    %c0_i32 = arith.constant 0 : i32
    %c0_i32_0 = arith.constant 0 : i32
    return %arg0, %c0_i32 : i32, i32
  }
  func.func @transform_1(%arg0: i32) -> (i32, i32) {
    %c0_i32 = arith.constant 0 : i32
    %c0_i32_0 = arith.constant 0 : i32
    %c0_i32_1 = arith.constant 0 : i32
    return %c0_i32, %c0_i32_0 : i32, i32
  }
  func.func @transform_2(%arg0: i32) -> (i32, i32) {
    %c0_i32 = arith.constant 0 : i32
    %c0_i32_0 = arith.constant 0 : i32
    %c0_i32_1 = arith.constant 0 : i32
    return %c0_i32, %c0_i32_0 : i32, i32
  }
  func.func @transform_3(%arg0: i32) -> (i32, i32) {
    %c0_i32 = arith.constant 0 : i32
    %c0_i32_0 = arith.constant 0 : i32
    return %arg0, %c0_i32 : i32, i32
  }
}

</mosaic_0001>

<llo_original>
// kernel: conv_block_forward.3
$region0: #{conv_block_forward.3}
  #allocation0 [shape = 'u32[]', space=smem, size = 0x4, offset = 0x4, fixed_abs, tag = 'smem constant byte address 0x4 - core index']
  #allocation1 [shape = 'u32[72,128]{1,0:T(1,128)}', space=vmem, size = 0x9000, scoped, tag = 'internal scratch']
  %s0 = inlined_call_operand.vmem [shape: bf16[128,128], index: 0, kind: input, shape index: {}]
  %s1 = inlined_call_operand.vmem [shape: f32[1,128], index: 1, kind: input, shape index: {}]
  %s2 = inlined_call_operand.vmem [shape: f32[1,128], index: 2, kind: input, shape index: {}]
  %s3 = inlined_call_operand.vmem [shape: f32[128,128], index: 3, kind: output, shape index: {}]
  %s4 = sld [smem:[#allocation0]]
  $region22: #{conv_block_forward.3} parent=0
    _
  %s6 = ssub.s32 1, %s4
  %s7 = scalar_select 0, %s6, %s4
  // Predicated region
  $region2: #{conv_block_forward.3} parent=0 // pred_check
    _
  $region3: #{conv_block_forward.3} parent=0 // pred_check_branch
    %9 = sbr.rel (0) target = $region5
  $region4: #{conv_block_forward.3} parent=0 // pred_region
    _
  $region5: #{conv_block_forward.3} parent=0 // pred_fallthru
    _
  // Predicated region
  $region6: #{conv_block_forward.3} parent=0 // pred_check
    _
  $region7: #{conv_block_forward.3} parent=0 // pred_check_branch
    %11 = sbr.rel (0) target = $region9
  $region8: #{conv_block_forward.3} parent=0 // pred_region
    _
  $region9: #{conv_block_forward.3} parent=0 // pred_fallthru
    _
  // Predicated region
  $region10: #{conv_block_forward.3} parent=0 // pred_check
    _
  $region11: #{conv_block_forward.3} parent=0 // pred_check_branch
    %13 = sbr.rel (0) target = $region13
  $region12: #{conv_block_forward.3} parent=0 // pred_region
    _
  $region13: #{conv_block_forward.3} parent=0 // pred_fallthru
    _
  %v14 = vld [vmem:[%s0] sm:$0xf]
  %v15 = vld [vmem:[%s0 + $0x4] sm:$0xf]
  %v16 = vld [vmem:[%s0 + $0x8] sm:$0xf]
  %v17 = vld [vmem:[%s0 + $0xc] sm:$0xf]
  %v18 = vld [vmem:[%s0 + $0x10] sm:$0xf]
  %v19 = vld [vmem:[%s0 + $0x14] sm:$0xf]
  %v20 = vld [vmem:[%s0 + $0x18] sm:$0xf]
  %v21 = vld [vmem:[%s0 + $0x1c] sm:$0xf]
  %v22 = vld [vmem:[%s0 + $0x20] sm:$0xf]
  %v23 = vld [vmem:[%s0 + $0x24] sm:$0xf]
  %v24 = vld [vmem:[%s0 + $0x28] sm:$0xf]
  %v25 = vld [vmem:[%s0 + $0x2c] sm:$0xf]
  %v26 = vld [vmem:[%s0 + $0x30] sm:$0xf]
  %v27 = vld [vmem:[%s0 + $0x34] sm:$0xf]
  %v28 = vld [vmem:[%s0 + $0x38] sm:$0xf]
  %v29 = vld [vmem:[%s0 + $0x3c] sm:$0xf]
  %v30 = vunpack.c.l.bf16 %v14
  %v31 = vunpack.c.l.bf16 %v15
  %v32 = vunpack.c.l.bf16 %v16
  %v33 = vunpack.c.l.bf16 %v17
  %v34 = vunpack.c.l.bf16 %v18
  %v35 = vunpack.c.l.bf16 %v19
  %v36 = vunpack.c.l.bf16 %v20
  %v37 = vunpack.c.l.bf16 %v21
  %v38 = vunpack.c.l.bf16 %v22
  %v39 = vunpack.c.l.bf16 %v23
  %v40 = vunpack.c.l.bf16 %v24
  %v41 = vunpack.c.l.bf16 %v25
  %v42 = vunpack.c.l.bf16 %v26
  %v43 = vunpack.c.l.bf16 %v27
  %v44 = vunpack.c.l.bf16 %v28
  %v45 = vunpack.c.l.bf16 %v29
  %v46 = vld [vmem:[%s1] sm:$0x1]
  %v48 = vperm.slane %v46, 0
  %v50 = vmul.f32 %v30, %v48
  %v51 = vmul.f32 %v31, %v48
  %v52 = vmul.f32 %v32, %v48
  %v53 = vmul.f32 %v33, %v48
  %v54 = vmul.f32 %v34, %v48
  %v55 = vmul.f32 %v35, %v48
  %v56 = vmul.f32 %v36, %v48
  %v57 = vmul.f32 %v37, %v48
  %v58 = vmul.f32 %v38, %v48
  %v59 = vmul.f32 %v39, %v48
  %v60 = vmul.f32 %v40, %v48
  %v61 = vmul.f32 %v41, %v48
  %v62 = vmul.f32 %v42, %v48
  %v63 = vmul.f32 %v43, %v48
  %v64 = vmul.f32 %v44, %v48
  %v65 = vmul.f32 %v45, %v48
  %v66 = vld [vmem:[%s2] sm:$0x1]
  %v68 = vperm.slane %v66, 0
  %v70 = vadd.f32 %v50, %v68
  %v71 = vadd.f32 %v51, %v68
  %v72 = vadd.f32 %v52, %v68
  %v73 = vadd.f32 %v53, %v68
  %v74 = vadd.f32 %v54, %v68
  %v75 = vadd.f32 %v55, %v68
  %v76 = vadd.f32 %v56, %v68
  %v77 = vadd.f32 %v57, %v68
  %v78 = vadd.f32 %v58, %v68
  %v79 = vadd.f32 %v59, %v68
  %v80 = vadd.f32 %v60, %v68
  %v81 = vadd.f32 %v61, %v68
  %v82 = vadd.f32 %v62, %v68
  %v83 = vadd.f32 %v63, %v68
  %v84 = vadd.f32 %v64, %v68
  %v85 = vadd.f32 %v65, %v68
  %vm86 = vcmp.gt.f32.partialorder %v70, 0.0
  %vm87 = vcmp.gt.f32.partialorder %v71, 0.0
  %vm88 = vcmp.gt.f32.partialorder %v72, 0.0
  %vm89 = vcmp.gt.f32.partialorder %v73, 0.0
  %vm90 = vcmp.gt.f32.partialorder %v74, 0.0
  %vm91 = vcmp.gt.f32.partialorder %v75, 0.0
  %vm92 = vcmp.gt.f32.partialorder %v76, 0.0
  %vm93 = vcmp.gt.f32.partialorder %v77, 0.0
  %vm94 = vcmp.gt.f32.partialorder %v78, 0.0
  %vm95 = vcmp.gt.f32.partialorder %v79, 0.0
  %vm96 = vcmp.gt.f32.partialorder %v80, 0.0
  %vm97 = vcmp.gt.f32.partialorder %v81, 0.0
  %vm98 = vcmp.gt.f32.partialorder %v82, 0.0
  %vm99 = vcmp.gt.f32.partialorder %v83, 0.0
  %vm100 = vcmp.gt.f32.partialorder %v84, 0.0
  %vm101 = vcmp.gt.f32.partialorder %v85, 0.0
  %v102 = vmul.f32 %v70, 0.2
  %v103 = vmul.f32 %v71, 0.2
  %v104 = vmul.f32 %v72, 0.2
  %v105 = vmul.f32 %v73, 0.2
  %v106 = vmul.f32 %v74, 0.2
  %v107 = vmul.f32 %v75, 0.2
  %v108 = vmul.f32 %v76, 0.2
  %v109 = vmul.f32 %v77, 0.2
  %v110 = vmul.f32 %v78, 0.2
  %v111 = vmul.f32 %v79, 0.2
  %v112 = vmul.f32 %v80, 0.2
  %v113 = vmul.f32 %v81, 0.2
  %v114 = vmul.f32 %v82, 0.2
  %v115 = vmul.f32 %v83, 0.2
  %v116 = vmul.f32 %v84, 0.2
  %v117 = vmul.f32 %v85, 0.2
  %v118 = vsel %vm86, %v70, %v102
  %v119 = vsel %vm87, %v71, %v103
  %v120 = vsel %vm88, %v72, %v104
  %v121 = vsel %vm89, %v73, %v105
  %v122 = vsel %vm90, %v74, %v106
  %v123 = vsel %vm91, %v75, %v107
  %v124 = vsel %vm92, %v76, %v108
  %v125 = vsel %vm93, %v77, %v109
  %v126 = vsel %vm94, %v78, %v110
  %v127 = vsel %vm95, %v79, %v111
  %v128 = vsel %vm96, %v80, %v112
  %v129 = vsel %vm97, %v81, %v113
  %v130 = vsel %vm98, %v82, %v114
  %v131 = vsel %vm99, %v83, %v115
  %v132 = vsel %vm100, %v84, %v116
  %v133 = vsel %vm101, %v85, %v117
  %134 = vst [vmem:[%s3] sm:$0xff] %v118
  %135 = vst [vmem:[%s3 + $0x8] sm:$0xff] %v119
  %136 = vst [vmem:[%s3 + $0x10] sm:$0xff] %v120
  %137 = vst [vmem:[%s3 + $0x18] sm:$0xff] %v121
  %138 = vst [vmem:[%s3 + $0x20] sm:$0xff] %v122
  %139 = vst [vmem:[%s3 + $0x28] sm:$0xff] %v123
  %140 = vst [vmem:[%s3 + $0x30] sm:$0xff] %v124
  %141 = vst [vmem:[%s3 + $0x38] sm:$0xff] %v125
  %142 = vst [vmem:[%s3 + $0x40] sm:$0xff] %v126
  %143 = vst [vmem:[%s3 + $0x48] sm:$0xff] %v127
  %144 = vst [vmem:[%s3 + $0x50] sm:$0xff] %v128
  %145 = vst [vmem:[%s3 + $0x58] sm:$0xff] %v129
  %146 = vst [vmem:[%s3 + $0x60] sm:$0xff] %v130
  %147 = vst [vmem:[%s3 + $0x68] sm:$0xff] %v131
  %148 = vst [vmem:[%s3 + $0x70] sm:$0xff] %v132
  %149 = vst [vmem:[%s3 + $0x78] sm:$0xff] %v133
  // Predicated region
  $region14: #{conv_block_forward.3} parent=0 // pred_check
    _
  $region15: #{conv_block_forward.3} parent=0 // pred_check_branch
    %151 = sbr.rel (0) target = $region17
  $region16: #{conv_block_forward.3} parent=0 // pred_region
    _
  $region17: #{conv_block_forward.3} parent=0 // pred_fallthru
    _
  // Predicated region
  $region18: #{conv_block_forward.3} parent=0 // pred_check
    _
  $region19: #{conv_block_forward.3} parent=0 // pred_check_branch
    %153 = sbr.rel (0) target = $region21
  $region20: #{conv_block_forward.3} parent=0 // pred_region
    _
  $region21: #{conv_block_forward.3} parent=0 // pred_fallthru
    _

// kernel: conv_block_forward.2
$region0: #{conv_block_forward.2}
  #allocation0 [shape = 'u32[]', space=smem, size = 0x4, offset = 0x4, fixed_abs, tag = 'smem constant byte address 0x4 - core index']
  #allocation1 [shape = 'u32[72,128]{1,0:T(1,128)}', space=vmem, size = 0x9000, scoped, tag = 'internal scratch']
  %s0 = inlined_call_operand.vmem [shape: bf16[128,64], index: 0, kind: input, shape index: {}]
  %s1 = inlined_call_operand.vmem [shape: bf16[64,128], index: 1, kind: input, shape index: {}]
  %s2 = inlined_call_operand.vmem [shape: bf16[128,128], index: 2, kind: output, shape index: {0}]
  %s3 = inlined_call_operand.vmem [shape: f32[1,2,128], index: 3, kind: output, shape index: {1}]
  %4 = xla_tuple %s2, %s3
  %s5 = sld [smem:[#allocation0]]
  $region26: #{conv_block_forward.2} parent=0
    _
  %s7 = ssub.s32 1, %s5
  %s8 = scalar_select 0, %s7, %s5
  // Predicated region
  $region2: #{conv_block_forward.2} parent=0 // pred_check
    _
  $region3: #{conv_block_forward.2} parent=0 // pred_check_branch
    %10 = sbr.rel (0) target = $region5
  $region4: #{conv_block_forward.2} parent=0 // pred_region
    _
  $region5: #{conv_block_forward.2} parent=0 // pred_fallthru
    _
  // Predicated region
  $region6: #{conv_block_forward.2} parent=0 // pred_check
    _
  $region7: #{conv_block_forward.2} parent=0 // pred_check_branch
    %12 = sbr.rel (0) target = $region9
  $region8: #{conv_block_forward.2} parent=0 // pred_region
    _
  $region9: #{conv_block_forward.2} parent=0 // pred_fallthru
    _
  %v14 = vld [vmem:[%s0] sm:$0xf]
  %v15 = vld [vmem:[%s0 + $0x4] sm:$0xf]
  %v16 = vld [vmem:[%s0 + $0x8] sm:$0xf]
  %v17 = vld [vmem:[%s0 + $0xc] sm:$0xf]
  %v18 = vld [vmem:[%s0 + $0x10] sm:$0xf]
  %v19 = vld [vmem:[%s0 + $0x14] sm:$0xf]
  %v20 = vld [vmem:[%s0 + $0x18] sm:$0xf]
  %v21 = vld [vmem:[%s0 + $0x1c] sm:$0xf]
  %v22 = vld [vmem:[%s0 + $0x20] sm:$0xf]
  %v23 = vld [vmem:[%s0 + $0x24] sm:$0xf]
  %v24 = vld [vmem:[%s0 + $0x28] sm:$0xf]
  %v25 = vld [vmem:[%s0 + $0x2c] sm:$0xf]
  %v26 = vld [vmem:[%s0 + $0x30] sm:$0xf]
  %v27 = vld [vmem:[%s0 + $0x34] sm:$0xf]
  %v28 = vld [vmem:[%s0 + $0x38] sm:$0xf]
  %v29 = vld [vmem:[%s0 + $0x3c] sm:$0xf]
  %v30 = vld [vmem:[%s1] sm:$0xf]
  %v31 = vld [vmem:[%s1 + $0x4] sm:$0xf]
  %v32 = vld [vmem:[%s1 + $0x8] sm:$0xf]
  %v33 = vld [vmem:[%s1 + $0xc] sm:$0xf]
  %v34 = vld [vmem:[%s1 + $0x10] sm:$0xf]
  %v35 = vld [vmem:[%s1 + $0x14] sm:$0xf]
  %v36 = vld [vmem:[%s1 + $0x18] sm:$0xf]
  %v37 = vld [vmem:[%s1 + $0x1c] sm:$0xf]
  %v54 = vunpack.c.l.b16 %v14
  %v55 = vunpack.c.l.b16 %v15
  %v56 = vunpack.c.l.b16 %v16
  %v57 = vunpack.c.l.b16 %v17
  %v58 = vunpack.c.l.b16 %v18
  %v59 = vunpack.c.l.b16 %v19
  %v60 = vunpack.c.l.b16 %v20
  %v61 = vunpack.c.l.b16 %v21
  %v62 = vunpack.c.l.b16 %v22
  %v63 = vunpack.c.l.b16 %v23
  %v64 = vunpack.c.l.b16 %v24
  %v65 = vunpack.c.l.b16 %v25
  %v66 = vunpack.c.l.b16 %v26
  %v67 = vunpack.c.l.b16 %v27
  %v68 = vunpack.c.l.b16 %v28
  %v69 = vunpack.c.l.b16 %v29
  %v70 = vpack.c.b16 %v55, %v54
  %v71 = vpack.c.b16 %v57, %v56
  %v72 = vpack.c.b16 %v59, %v58
  %v73 = vpack.c.b16 %v61, %v60
  %v74 = vpack.c.b16 %v63, %v62
  %v75 = vpack.c.b16 %v65, %v64
  %v76 = vpack.c.b16 %v67, %v66
  %v77 = vpack.c.b16 %v69, %v68
  %v86 = vunpack.c.l.b16 %v30
  %v87 = vunpack.c.l.b16 %v31
  %v88 = vunpack.c.l.b16 %v32
  %v89 = vunpack.c.l.b16 %v33
  %v90 = vunpack.c.l.b16 %v34
  %v91 = vunpack.c.l.b16 %v35
  %v92 = vunpack.c.l.b16 %v36
  %v93 = vunpack.c.l.b16 %v37
  %v94 = vpack.c.b16 %v87, %v86
  %v95 = vpack.c.b16 %v89, %v88
  %v96 = vpack.c.b16 %v91, %v90
  %v97 = vpack.c.b16 %v93, %v92
  %vm102 = vcmask 523264
  %v104 = vsel %vm102, %v70, 0
  %v107 = vsel %vm102, %v71, 0
  %v110 = vsel %vm102, %v72, 0
  %v113 = vsel %vm102, %v73, 0
  %v116 = vsel %vm102, %v74, 0
  %v119 = vsel %vm102, %v75, 0
  %v122 = vsel %vm102, %v76, 0
  %v125 = vsel %vm102, %v77, 0
  %127 = vmatpush.bf16.msra.mxu0 0
  %128 = vmatpush.bf16.msra.mxu0 0
  %129 = vmatpush.bf16.msra.mxu0 0
  %130 = vmatpush.bf16.msra.mxu0 0
  %131 = vmatpush.bf16.msra.mxu0 %v97
  %132 = vmatpush.bf16.msra.mxu0 %v96
  %133 = vmatpush.bf16.msra.mxu0 %v95
  %134 = vmatpush.bf16.msra.mxu0 %v94
  %135 = vmatmul.bf16.gmra.mxu0 %v104
  %v136 = vpop.f32.mrf.mxu0
  %v137 = vadd.f32 0.0, %v136
  %v138 = vpop.f32.mrf.mxu0
  %v139 = vadd.f32 0.0, %v138
  %140 = vmatmul.bf16.gmra.mxu0 %v107
  %v141 = vpop.f32.mrf.mxu0
  %v142 = vadd.f32 0.0, %v141
  %v143 = vpop.f32.mrf.mxu0
  %v144 = vadd.f32 0.0, %v143
  %145 = vmatmul.bf16.gmra.mxu0 %v110
  %v146 = vpop.f32.mrf.mxu0
  %v147 = vadd.f32 0.0, %v146
  %v148 = vpop.f32.mrf.mxu0
  %v149 = vadd.f32 0.0, %v148
  %150 = vmatmul.bf16.gmra.mxu0 %v113
  %v151 = vpop.f32.mrf.mxu0
  %v152 = vadd.f32 0.0, %v151
  %v153 = vpop.f32.mrf.mxu0
  %v154 = vadd.f32 0.0, %v153
  %155 = vmatmul.bf16.gmra.mxu0 %v116
  %v156 = vpop.f32.mrf.mxu0
  %v157 = vadd.f32 0.0, %v156
  %v158 = vpop.f32.mrf.mxu0
  %v159 = vadd.f32 0.0, %v158
  %160 = vmatmul.bf16.gmra.mxu0 %v119
  %v161 = vpop.f32.mrf.mxu0
  %v162 = vadd.f32 0.0, %v161
  %v163 = vpop.f32.mrf.mxu0
  %v164 = vadd.f32 0.0, %v163
  %165 = vmatmul.bf16.gmra.mxu0 %v122
  %v166 = vpop.f32.mrf.mxu0
  %v167 = vadd.f32 0.0, %v166
  %v168 = vpop.f32.mrf.mxu0
  %v169 = vadd.f32 0.0, %v168
  %170 = vmatmul.bf16.gmra.mxu0 %v125
  %v171 = vpop.f32.mrf.mxu0
  %v172 = vadd.f32 0.0, %v171
  %v173 = vpop.f32.mrf.mxu0
  %v174 = vadd.f32 0.0, %v173
  %175 = vdwg.mxu0
  %v176 = vpack.c.bf16 %v137, %v137
  %v177 = vpack.c.bf16 %v139, %v139
  %v178 = vpack.c.bf16 %v142, %v142
  %v179 = vpack.c.bf16 %v144, %v144
  %v180 = vpack.c.bf16 %v147, %v147
  %v181 = vpack.c.bf16 %v149, %v149
  %v182 = vpack.c.bf16 %v152, %v152
  %v183 = vpack.c.bf16 %v154, %v154
  %v184 = vpack.c.bf16 %v157, %v157
  %v185 = vpack.c.bf16 %v159, %v159
  %v186 = vpack.c.bf16 %v162, %v162
  %v187 = vpack.c.bf16 %v164, %v164
  %v188 = vpack.c.bf16 %v167, %v167
  %v189 = vpack.c.bf16 %v169, %v169
  %v190 = vpack.c.bf16 %v172, %v172
  %v191 = vpack.c.bf16 %v174, %v174
  %192 = vst [vmem:[%s2] sm:$0xf] %v176
  %193 = vst [vmem:[%s2 + $0x4] sm:$0xf] %v177
  %194 = vst [vmem:[%s2 + $0x8] sm:$0xf] %v178
  %195 = vst [vmem:[%s2 + $0xc] sm:$0xf] %v179
  %196 = vst [vmem:[%s2 + $0x10] sm:$0xf] %v180
  %197 = vst [vmem:[%s2 + $0x14] sm:$0xf] %v181
  %198 = vst [vmem:[%s2 + $0x18] sm:$0xf] %v182
  %199 = vst [vmem:[%s2 + $0x1c] sm:$0xf] %v183
  %200 = vst [vmem:[%s2 + $0x20] sm:$0xf] %v184
  %201 = vst [vmem:[%s2 + $0x24] sm:$0xf] %v185
  %202 = vst [vmem:[%s2 + $0x28] sm:$0xf] %v186
  %203 = vst [vmem:[%s2 + $0x2c] sm:$0xf] %v187
  %204 = vst [vmem:[%s2 + $0x30] sm:$0xf] %v188
  %205 = vst [vmem:[%s2 + $0x34] sm:$0xf] %v189
  %206 = vst [vmem:[%s2 + $0x38] sm:$0xf] %v190
  %207 = vst [vmem:[%s2 + $0x3c] sm:$0xf] %v191
  %v208 = vadd.f32 %v137, %v139
  %v209 = vadd.f32 %v208, %v142
  %v210 = vadd.f32 %v209, %v144
  %v211 = vadd.f32 %v210, %v147
  %v212 = vadd.f32 %v211, %v149
  %v213 = vadd.f32 %v212, %v152
  %v214 = vadd.f32 %v213, %v154
  %v215 = vadd.f32 %v214, %v157
  %v216 = vadd.f32 %v215, %v159
  %v217 = vadd.f32 %v216, %v162
  %v218 = vadd.f32 %v217, %v164
  %v219 = vadd.f32 %v218, %v167
  %v220 = vadd.f32 %v219, %v169
  %v221 = vadd.f32 %v220, %v172
  %v222 = vadd.f32 %v221, %v174
  %v223 = vrot.slane %v222, 4
  %v224 = vadd.f32 %v222, %v223
  %v225 = vrot.slane %v224, 2
  %v226 = vadd.f32 %v224, %v225
  %v227 = vrot.slane %v226, 1
  %v228 = vadd.f32 %v226, %v227
  %v229 = vmul.f32 %v137, %v137
  %v230 = vmul.f32 %v139, %v139
  %v231 = vmul.f32 %v142, %v142
  %v232 = vmul.f32 %v144, %v144
  %v233 = vmul.f32 %v147, %v147
  %v234 = vmul.f32 %v149, %v149
  %v235 = vmul.f32 %v152, %v152
  %v236 = vmul.f32 %v154, %v154
  %v237 = vmul.f32 %v157, %v157
  %v238 = vmul.f32 %v159, %v159
  %v239 = vmul.f32 %v162, %v162
  %v240 = vmul.f32 %v164, %v164
  %v241 = vmul.f32 %v167, %v167
  %v242 = vmul.f32 %v169, %v169
  %v243 = vmul.f32 %v172, %v172
  %v244 = vmul.f32 %v174, %v174
  %v245 = vadd.f32 %v229, %v230
  %v246 = vadd.f32 %v245, %v231
  %v247 = vadd.f32 %v246, %v232
  %v248 = vadd.f32 %v247, %v233
  %v249 = vadd.f32 %v248, %v234
  %v250 = vadd.f32 %v249, %v235
  %v251 = vadd.f32 %v250, %v236
  %v252 = vadd.f32 %v251, %v237
  %v253 = vadd.f32 %v252, %v238
  %v254 = vadd.f32 %v253, %v239
  %v255 = vadd.f32 %v254, %v240
  %v256 = vadd.f32 %v255, %v241
  %v257 = vadd.f32 %v256, %v242
  %v258 = vadd.f32 %v257, %v243
  %v259 = vadd.f32 %v258, %v244
  %v260 = vrot.slane %v259, 4
  %v261 = vadd.f32 %v259, %v260
  %v262 = vrot.slane %v261, 2
  %v263 = vadd.f32 %v261, %v262
  %v264 = vrot.slane %v263, 1
  %v265 = vadd.f32 %v263, %v264
  %vm266 = vcmask 1040384
  %v267 = vsel %vm266, %v228, %v265
  %268 = vst [vmem:[%s3] sm:$0x3] %v267
  // Predicated region
  $region10: #{conv_block_forward.2} parent=0 // pred_check
    _
  $region11: #{conv_block_forward.2} parent=0 // pred_check_branch
    %270 = sbr.rel (0) target = $region13
  $region12: #{conv_block_forward.2} parent=0 // pred_region
    _
  $region13: #{conv_block_forward.2} parent=0 // pred_fallthru
    _
  // Predicated region
  $region14: #{conv_block_forward.2} parent=0 // pred_check
    _
  $region15: #{conv_block_forward.2} parent=0 // pred_check_branch
    %272 = sbr.rel (0) target = $region17
  $region16: #{conv_block_forward.2} parent=0 // pred_region
    _
  $region17: #{conv_block_forward.2} parent=0 // pred_fallthru
    _
  // Predicated region
  $region18: #{conv_block_forward.2} parent=0 // pred_check
    _
  $region19: #{conv_block_forward.2} parent=0 // pred_check_branch
    %274 = sbr.rel (0) target = $region21
  $region20: #{conv_block_forward.2} parent=0 // pred_region
    _
  $region21: #{conv_block_forward.2} parent=0 // pred_fallthru
    _
  // Predicated region
  $region22: #{conv_block_forward.2} parent=0 // pred_check
    _
  $region23: #{conv_block_forward.2} parent=0 // pred_check_branch
    %276 = sbr.rel (0) target = $region25
  $region24: #{conv_block_forward.2} parent=0 // pred_region
    _
  $region25: #{conv_block_forward.2} parent=0 // pred_fallthru
    _

</llo_original>
